<compile_context>
chip_gen: v7x
topology: tpu7x:2x2x1
jax: 0.10.0
libtpu: 0.0.40
codegen_flags: <defaults>
</compile_context>

<pallas_src>
import jax
import jax.numpy as jnp
from jax.experimental import pallas as pl
from jax.experimental.pallas import tpu as pltpu

BN_EPS = 1e-5
_BLOCK_TARGET_BYTES = 4 * 1024 * 1024     # per-block HBM->VMEM target (v5e-safe when 2x buffered)
_VMEM_LIMIT_BYTES = 32 * 1024 * 1024      # explicit scoped-VMEM limit for both passes


def _stats_decim_kernel(x_ref, sel_ref, psum_ref, psq_ref, xd_ref):
    """One (C, tile_ho, 2*Wp) block: per-channel partial sums + stride-2 decimation."""
    xb = x_ref[...]                                          # (C, tile_ho, 2*Wp) f32

    # --- batch-norm statistics (partial, per (n, h-tile)) ---------------------------
    s_w = jnp.sum(xb, axis=2)                                # (C, tile_ho)
    q_w = jnp.sum(xb * xb, axis=2)                           # (C, tile_ho)
    psum_ref[...] = jnp.sum(s_w, axis=1, keepdims=True)      # (C, 1)
    psq_ref[...] = jnp.sum(q_w, axis=1, keepdims=True)       # (C, 1)

    # --- stride-2 decimation --------------------------------------------------------
    C, tile_ho, w2 = xb.shape
    wp = w2 // 2
    wo = sel_ref.shape[1]
    xe = xb[:, :, :wp]                                       # even input rows (static slice)
    # tile_ho % 8 == 0 -> this reshape is a layout-preserving shape cast (no data movement).
    xe2 = xe.reshape(C * tile_ho, wp)
    # Single even-column selector matmul on the whole slab (never per row).
    xs = jnp.dot(xe2, sel_ref[...], preferred_element_type=jnp.float32)   # (C*tile_ho, Wo)
    xd_ref[...] = xs.reshape(C, tile_ho, wo)


def _conv1x1_kernel(xd_ref, w_ref, b_ref, o_ref):
    """Folded BN + 1x1 conv: one (C,C)x(C,tile_L) matmul, lane-dense store."""
    o_ref[...] = (jnp.dot(w_ref[...], xd_ref[...], preferred_element_type=jnp.float32)
                  + b_ref[...]).astype(o_ref.dtype)


def _pick_tile_ho(ho_p, c, wp, target_bytes=_BLOCK_TARGET_BYTES):
    """Largest multiple-of-8 divisor of ho_p whose input block fits the target."""
    best = 8
    t = 8
    while t <= ho_p:
        if ho_p % t == 0 and c * t * (2 * wp) * 4 <= target_bytes:
            best = t
        t += 8
    return best


def _pick_tile_l(l, c, target_bytes=_BLOCK_TARGET_BYTES):
    """Full extent if it fits, else the largest multiple-of-128 divisor that fits."""
    if c * l * 4 <= target_bytes:
        return l
    best = None
    m = 128
    while m < l:
        if l % m == 0 and c * m * 4 <= target_bytes:
            best = m
        m += 128
    return best if best is not None else l


def ident_forward(x, conv_w, bn_gamma, bn_beta, *, reduction, tile_ho=None, tile_l=None):
    """x: (N, C, H, W) float32. Returns NCHW output matching the PyTorch Ident module."""
    if not reduction:
        return x                                             # pure identity path

    N, C, H, W = x.shape
    Ho, Wo = (H + 1) // 2, (W + 1) // 2                      # Conv2d(k=1, stride=2) output

    # Pad H to a multiple of 16 (so Ho_p % 8 == 0 -> free in-kernel reshape) and W to even.
    # Pad pixels are zero: never selected by the stride-2 taps, contribute 0 to the sums.
    Hp = -(-H // 16) * 16
    Wp = W + (W % 2)
    Ho_p = Hp // 2
    x_f = x.astype(jnp.float32)
    if (Hp, Wp) != (H, W):
        x_f = jnp.pad(x_f, ((0, 0), (0, 0), (0, Hp - H), (0, Wp - W)))

    # Row-paired view: element [n, c, h, j] = x[n, c, 2h + j//Wp, j % Wp]  (free reshape).
    x_rows = x_f.reshape(N, C, Ho_p, 2 * Wp)

    if tile_ho is None:
        tile_ho = _pick_tile_ho(Ho_p, C, Wp)
    assert tile_ho % 8 == 0 and Ho_p % tile_ho == 0, "tile_ho must be a mult-of-8 divisor"
    nh = Ho_p // tile_ho

    # Constant even-column selector: sel[2k, k] = 1  (VMEM-resident, (Wp, Wo)).
    sel = (jnp.arange(Wp)[:, None] == 2 * jnp.arange(Wo)[None, :]).astype(jnp.float32)

    # ---- pass 1: stats + stride-2 decimation (single traversal of x) ----------------
    psum, psq, xd = pl.pallas_call(
        _stats_decim_kernel,
        out_shape=(jax.ShapeDtypeStruct((N, nh, C, 1), jnp.float32),
                   jax.ShapeDtypeStruct((N, nh, C, 1), jnp.float32),
                   jax.ShapeDtypeStruct((N, C, Ho_p, Wo), jnp.float32)),
        grid=(N, nh),
        in_specs=[pl.BlockSpec((None, C, tile_ho, 2 * Wp), lambda n, i: (n, 0, i, 0)),
                  pl.BlockSpec((Wp, Wo), lambda n, i: (0, 0))],
        out_specs=(pl.BlockSpec((None, None, C, 1), lambda n, i: (n, i, 0, 0)),
                   pl.BlockSpec((None, None, C, 1), lambda n, i: (n, i, 0, 0)),
                   pl.BlockSpec((None, C, tile_ho, Wo), lambda n, i: (n, 0, i, 0))),
        compiler_params=pltpu.CompilerParams(
            dimension_semantics=("parallel", "parallel"),
            vmem_limit_bytes=_VMEM_LIMIT_BYTES),
    )(x_rows, sel)

    # ---- fold BatchNorm (training-mode batch stats) into the 1x1 conv ---------------
    cnt = float(N * H * W)                                   # true (unpadded) pixel count
    mean = jnp.sum(psum, axis=(0, 1))[:, 0] / cnt                                # (C,)
    e2 = jnp.sum(psq, axis=(0, 1))[:, 0] / cnt
    var = jnp.maximum(e2 - mean * mean, 0.0)                                     # (C,)
    scale = bn_gamma.astype(jnp.float32) * jax.lax.rsqrt(var + BN_EPS)           # (C,)
    w2d = conv_w.reshape(C, C).astype(jnp.float32)           # (c_out, c_in)
    w_fold = w2d * scale[None, :]
    b_fold = (w2d @ (bn_beta.astype(jnp.float32) - mean * scale))[:, None]       # (C, 1)

    # ---- pass 2: one channel matmul per lane-dense (C, tile_L) block ----------------
    L = Ho_p * Wo
    xd_flat = xd.reshape(N, C, L)                            # contiguous -> free
    if tile_l is None:
        tile_l = _pick_tile_l(L, C)
    assert L % tile_l == 0 and (tile_l == L or tile_l % 128 == 0), "bad tile_l"
    nl = L // tile_l

    y_flat = pl.pallas_call(
        _conv1x1_kernel,
        out_shape=jax.ShapeDtypeStruct((N, C, L), jnp.float32),
        grid=(N, nl),
        in_specs=[pl.BlockSpec((None, C, tile_l), lambda n, j: (n, 0, j)),
                  pl.BlockSpec((C, C), lambda n, j: (0, 0)),
                  pl.BlockSpec((C, 1), lambda n, j: (0, 0))],
        out_specs=pl.BlockSpec((None, C, tile_l), lambda n, j: (n, 0, j)),
        compiler_params=pltpu.CompilerParams(
            dimension_semantics=("parallel", "parallel"),
            vmem_limit_bytes=_VMEM_LIMIT_BYTES),
    )(xd_flat, w_fold, b_fold)

    # Contiguous reshape + row slice back to the NCHW result (drops H padding rows).
    return y_flat.reshape(N, C, Ho_p, Wo)[:, :, :Ho, :]


def _reference(x, conv_w, bn_gamma, bn_beta):
    """Pure-JAX reference of BN(train) + 1x1 stride-2 conv."""
    mean = jnp.mean(x, axis=(0, 2, 3), keepdims=True)
    var = jnp.mean((x - mean) ** 2, axis=(0, 2, 3), keepdims=True)
    g = bn_gamma.reshape(1, -1, 1, 1)
    b = bn_beta.reshape(1, -1, 1, 1)
    xn = (x - mean) * jax.lax.rsqrt(var + BN_EPS) * g + b
    xs = xn[:, :, ::2, ::2]
    return jnp.einsum("oc,nchw->nohw", conv_w.reshape(conv_w.shape[0], -1), xs)


if __name__ == "__main__":
    root = jax.random.PRNGKey(0)

    def run_case(case_id, N, C, H, W, random_affine=False, **tiles):
        kx, kw, kg, kb = jax.random.split(jax.random.fold_in(root, case_id), 4)
        x = jax.random.normal(kx, (N, C, H, W), dtype=jnp.float32)
        conv_w = 0.1 * jax.random.normal(kw, (C, C, 1, 1), dtype=jnp.float32)
        if random_affine:
            gamma = 1.0 + 0.1 * jax.random.normal(kg, (C,), dtype=jnp.float32)
            beta = 0.1 * jax.random.normal(kb, (C,), dtype=jnp.float32)
        else:  # fresh nn.BatchNorm2d init: gamma=1, beta=0
            gamma = jnp.ones((C,), dtype=jnp.float32)
            beta = jnp.zeros((C,), dtype=jnp.float32)
        y = jax.block_until_ready(
            ident_forward(x, conv_w, gamma, beta, reduction=True, **tiles))
        y_ref = _reference(x, conv_w, gamma, beta)
        assert y.shape == (N, C, (H + 1) // 2, (W + 1) // 2)
        err = float(jnp.max(jnp.abs(y - y_ref)))
        assert jnp.allclose(y, y_ref, atol=1e-4, rtol=1e-4), f"case {case_id}: max err {err}"

    run_case(0, 2, 4, 16, 16)                                             # requested shape
    run_case(1, 2, 8, 64, 32, random_affine=True, tile_ho=8, tile_l=256)  # multi-tile grids
    run_case(2, 1, 4, 15, 15)                                             # odd spatial (pad)

    # reduction=False path: pure identity (no parameters, no kernel needed).
    x_id = jax.random.normal(root, (2, 4, 16, 16), dtype=jnp.float32)
    y_id = jax.block_until_ready(ident_forward(x_id, None, None, None, reduction=False))
    assert jnp.array_equal(y_id, x_id)

    print("KERNEL_OK")
</pallas_src>

<mosaic_0001>
module attributes {stable_mosaic.version = 11 : i64} {
  func.func @_stats_decim_kernel(%arg0: i32, %arg1: i32, %arg2: memref<1x4x8x32xf32, #tpu.memory_space<vmem>>, %arg3: memref<16x8xf32, #tpu.memory_space<vmem>>, %arg4: memref<1x1x4x1xf32, #tpu.memory_space<vmem>>, %arg5: memref<1x1x4x1xf32, #tpu.memory_space<vmem>>, %arg6: memref<1x4x8x8xf32, #tpu.memory_space<vmem>>) attributes {dimension_semantics = [#tpu.dimension_semantics<parallel>, #tpu.dimension_semantics<parallel>], iteration_bounds = array<i64: 2, 1>, scalar_prefetch = 0 : i64, scratch_operands = 0 : i64, tpu.core_type = #tpu.core_type<tc>, window_params = [{transform_indices = @transform_0, window_bounds = array<i64: 1, 4, 8, 32>}, {pipeline_mode = #tpu.pipeline_mode<synchronous>, transform_indices = @transform_1, window_bounds = array<i64: 16, 8>}, {transform_indices = @transform_2, window_bounds = array<i64: 1, 1, 4, 1>}, {transform_indices = @transform_3, window_bounds = array<i64: 1, 1, 4, 1>}, {transform_indices = @transform_4, window_bounds = array<i64: 1, 4, 8, 8>}]} {
    %c0 = arith.constant 0 : index
    %c0_0 = arith.constant 0 : index
    %c0_1 = arith.constant 0 : index
    %c0_2 = arith.constant 0 : index
    %0 = vector.load %arg2[%c0, %c0_0, %c0_1, %c0_2] : memref<1x4x8x32xf32, #tpu.memory_space<vmem>>, vector<1x4x8x32xf32>
    %1 = vector.shape_cast %0 : vector<1x4x8x32xf32> to vector<4x8x32xf32>
    %cst = arith.constant dense<0.000000e+00> : vector<4x8xf32>
    %2 = vector.multi_reduction <add>, %1, %cst [2] : vector<4x8x32xf32> to vector<4x8xf32>
    %3 = arith.mulf %1, %1 : vector<4x8x32xf32>
    %cst_3 = arith.constant dense<0.000000e+00> : vector<4x8xf32>
    %4 = vector.multi_reduction <add>, %3, %cst_3 [2] : vector<4x8x32xf32> to vector<4x8xf32>
    %cst_4 = arith.constant dense<0.000000e+00> : vector<4xf32>
    %5 = vector.multi_reduction <add>, %2, %cst_4 [1] : vector<4x8xf32> to vector<4xf32>
    %6 = vector.shape_cast %5 : vector<4xf32> to vector<4x1xf32>
    %c0_5 = arith.constant 0 : index
    %c0_6 = arith.constant 0 : index
    %c0_7 = arith.constant 0 : index
    %c0_8 = arith.constant 0 : index
    %7 = vector.load %arg4[%c0_5, %c0_6, %c0_7, %c0_8] : memref<1x1x4x1xf32, #tpu.memory_space<vmem>>, vector<1x1x4x1xf32>
    %8 = vector.shape_cast %7 : vector<1x1x4x1xf32> to vector<4x1xf32>
    %9 = vector.shape_cast %6 : vector<4x1xf32> to vector<1x1x4x1xf32>
    tpu.vector_store %arg4[%c0_5, %c0_6, %c0_7, %c0_8], %9 {strides = array<i32>} : memref<1x1x4x1xf32, #tpu.memory_space<vmem>>, vector<1x1x4x1xf32>,
    %cst_9 = arith.constant dense<0.000000e+00> : vector<4xf32>
    %10 = vector.multi_reduction <add>, %4, %cst_9 [1] : vector<4x8xf32> to vector<4xf32>
    %11 = vector.shape_cast %10 : vector<4xf32> to vector<4x1xf32>
    %c0_10 = arith.constant 0 : index
    %c0_11 = arith.constant 0 : index
    %c0_12 = arith.constant 0 : index
    %c0_13 = arith.constant 0 : index
    %12 = vector.load %arg5[%c0_10, %c0_11, %c0_12, %c0_13] : memref<1x1x4x1xf32, #tpu.memory_space<vmem>>, vector<1x1x4x1xf32>
    %13 = vector.shape_cast %12 : vector<1x1x4x1xf32> to vector<4x1xf32>
    %14 = vector.shape_cast %11 : vector<4x1xf32> to vector<1x1x4x1xf32>
    tpu.vector_store %arg5[%c0_10, %c0_11, %c0_12, %c0_13], %14 {strides = array<i32>} : memref<1x1x4x1xf32, #tpu.memory_space<vmem>>, vector<1x1x4x1xf32>,
    %15 = vector.extract_strided_slice %1 {offsets = [0, 0, 0], sizes = [4, 8, 16], strides = [1, 1, 1]} : vector<4x8x32xf32> to vector<4x8x16xf32>
    %16 = vector.shape_cast %15 : vector<4x8x16xf32> to vector<32x16xf32>
    %c0_14 = arith.constant 0 : index
    %c0_15 = arith.constant 0 : index
    %17 = vector.load %arg3[%c0_14, %c0_15] : memref<16x8xf32, #tpu.memory_space<vmem>>, vector<16x8xf32>
    %cst_16 = arith.constant dense<0.000000e+00> : vector<32x8xf32>
    %18 = tpu.matmul %16, %17, %cst_16 {dimension_numbers = #tpu.dot_dimension_numbers<[1], [0], [0], [1], [0, 0, 1, 1], [], []>} : vector<32x16xf32>, vector<16x8xf32>, vector<32x8xf32> -> vector<32x8xf32>
    %19 = vector.shape_cast %18 : vector<32x8xf32> to vector<4x8x8xf32>
    %c0_17 = arith.constant 0 : index
    %c0_18 = arith.constant 0 : index
    %c0_19 = arith.constant 0 : index
    %c0_20 = arith.constant 0 : index
    %20 = vector.load %arg6[%c0_17, %c0_18, %c0_19, %c0_20] : memref<1x4x8x8xf32, #tpu.memory_space<vmem>>, vector<1x4x8x8xf32>
    %21 = vector.shape_cast %20 : vector<1x4x8x8xf32> to vector<4x8x8xf32>
    %22 = vector.shape_cast %19 : vector<4x8x8xf32> to vector<1x4x8x8xf32>
    tpu.vector_store %arg6[%c0_17, %c0_18, %c0_19, %c0_20], %22 {strides = array<i32>} : memref<1x4x8x8xf32, #tpu.memory_space<vmem>>, vector<1x4x8x8xf32>,
    return
  }
  func.func @transform_0(%arg0: i32, %arg1: i32) -> (i32, i32, i32, i32) {
    %c0_i32 = arith.constant 0 : i32
    %c0_i32_0 = arith.constant 0 : i32
    %c0_i32_1 = arith.constant 0 : i32
    return %arg0, %c0_i32, %arg1, %c0_i32_0 : i32, i32, i32, i32
  }
  func.func @transform_1(%arg0: i32, %arg1: i32) -> (i32, i32) {
    %c0_i32 = arith.constant 0 : i32
    %c0_i32_0 = arith.constant 0 : i32
    %c0_i32_1 = arith.constant 0 : i32
    return %c0_i32, %c0_i32_0 : i32, i32
  }
  func.func @transform_2(%arg0: i32, %arg1: i32) -> (i32, i32, i32, i32) {
    %c0_i32 = arith.constant 0 : i32
    %c0_i32_0 = arith.constant 0 : i32
    %c0_i32_1 = arith.constant 0 : i32
    return %arg0, %arg1, %c0_i32, %c0_i32_0 : i32, i32, i32, i32
  }
  func.func @transform_3(%arg0: i32, %arg1: i32) -> (i32, i32, i32, i32) {
    %c0_i32 = arith.constant 0 : i32
    %c0_i32_0 = arith.constant 0 : i32
    %c0_i32_1 = arith.constant 0 : i32
    return %arg0, %arg1, %c0_i32, %c0_i32_0 : i32, i32, i32, i32
  }
  func.func @transform_4(%arg0: i32, %arg1: i32) -> (i32, i32, i32, i32) {
    %c0_i32 = arith.constant 0 : i32
    %c0_i32_0 = arith.constant 0 : i32
    %c0_i32_1 = arith.constant 0 : i32
    return %arg0, %c0_i32, %arg1, %c0_i32_0 : i32, i32, i32, i32
  }
}

</mosaic_0001>

<llo_original>
// kernel: tpu_custom_call.1
$region0: #{tpu_custom_call.1}
  #allocation0 [shape = 'u32[]', space=smem, size = 0x4, offset = 0x4, fixed_abs, tag = 'smem constant byte address 0x4 - core index']
  #allocation1 [shape = 'u32[144,128]{1,0:T(1,128)}', space=vmem, size = 0x12000, scoped, tag = 'internal scratch']
  %s0 = inlined_call_operand.hbm [shape: f32[2,4,8,32], index: 0, kind: input, shape index: {}]
  %s1 = inlined_call_operand.vmem [shape: f32[16,8], index: 1, kind: input, shape index: {}]
  %s2 = inlined_call_operand.vmem [shape: f32[2,1,4,1], index: 2, kind: output, shape index: {0}]
  %s3 = inlined_call_operand.vmem [shape: f32[2,1,4,1], index: 3, kind: output, shape index: {1}]
  %s4 = inlined_call_operand.hbm [shape: f32[2,4,8,8], index: 4, kind: output, shape index: {2}]
  %5 = xla_tuple %s2, %s3, %s4
  %s6 = sld [smem:[#allocation0]]
  $region61: #{tpu_custom_call.1} parent=0
    _
  %s8 = ssub.s32 1, %s6
  %s9 = scalar_select 0, %s8, %s6
  $region1: #{tpu_custom_call.1} parent=0
    #allocation2 [shape = 'u8[32768]{0}', space=vmem, size = 0x8000, scoped, tag = 'input window, operand 0']
    #allocation3 [shape = 's32[2]{0}', space=sflag, size = 0x8, scoped, tag = 'scoped memory for tpu_custom_call.1']
    #allocation4 [shape = 's32[2]{0}', space=sflag, size = 0x8, scoped, tag = 'scoped memory for tpu_custom_call.1']
    #allocation5 [shape = 'u8[32768]{0}', space=vmem, size = 0x8000, scoped, tag = 'output window, operand 2']
    %10 = vsyncpa [#allocation3], 0
    %s11 = scalar_lea.sflag [#allocation3], 1
    %12 = vsyncpa %s11, 0
    %13 = vsyncpa [#allocation4], 0
    %s14 = scalar_lea.sflag [#allocation4], 1
    %15 = vsyncpa %s14, 0
    loop: start=0, step=1, limit=4
    $region2: #{tpu_custom_call.1} parent=1 // loop_pre_header
      _
    $region3: #{tpu_custom_call.1} parent=1 // loop_header
      %s17 = sphi 0, %s21
      %p18 = scmp.ge.s32.totalorder %s17, 4
      %s24 = sphi 0, %s36
      %s25 = sphi 0, %s32
      %s26 = sphi 0, %s24
      %s27 = sphi 0, %s25
      %s28 = sphi 0, %s26
      %s29 = sphi 0, %s27
      %s41 = sphi 0, %s43
      %s44 = sphi 0, %s41
      %s45 = sphi 0, %s44
      %s61 = sphi 0, %s45
      %s65 = sphi 0, %s65
      %s67 = sphi 0, %s65
      %s68 = sphi 0, %s67
      %s82 = sphi 0, %s68
      %s90 = sphi 0, %s92
      %s93 = sphi 0, %s90
      %s94 = sphi 0, %s93
      %s110 = sphi 0, %s94
      %s118 = sphi 0, %s120
      %s121 = sphi 0, %s118
      %s122 = sphi 0, %s121
      %s138 = sphi 0, %s122
      %s146 = sphi 0, %s148
      %s149 = sphi 0, %s146
      %s150 = sphi 0, %s149
      %s166 = sphi 0, %s150
    $region4: #{tpu_custom_call.1} parent=1 // loop_header_branch
      %20 = sbr.rel (%p18) target = $region8
    $region5: #{tpu_custom_call.1} parent=1 // loop_body
      %s22 = ssub.s32 %s17, 1
      %s23 = ssub.s32 %s17, 2
      %s30 = sadd.s32 1, %s25
      %p31 = scmp.ge.s32.totalorder %s30, 1
      %s32 = scalar_select %p31, 0, %s30
      %s33 = sadd.s32 1, %s24
      %s34 = scalar_select %p31, %s33, %s24
      %p35 = scmp.ge.s32.totalorder %s34, 2
      %s36 = scalar_select %p35, 0, %s34
      %s37 = ssub.s32 %s24, %s36
      %s38 = ssub.s32 %s25, %s32
      %s39 = sor.u32 %s37, %s38
      %p40 = scmp.eq.s32.totalorder %s39, 0
      %s42 = sadd.s32 %s41, 1
      %s43 = scalar_select %p40, %s41, %s42
      %p46 = pneg %p40
      %p47 = scmp.eq.s32.totalorder %s17, 1
      %p48 = por %p46, %p47
      %p49 = scmp.ne.s32.totalorder %s41, %s44
      %p50 = scmp.eq.s32.totalorder %s17, 0
      %p51 = por %p49, %p50
      %p52 = scmp.ne.s32.totalorder %s41, %s44
      %p53 = scmp.eq.s32.totalorder %s22, 1
      %p54 = por %p52, %p53
      %p55 = scmp.ne.s32.totalorder %s44, %s45
      %p56 = scmp.eq.s32.totalorder %s22, 0
      %p57 = por %p55, %p56
      %p58 = scmp.ne.s32.totalorder %s44, %s45
      %p59 = scmp.eq.s32.totalorder %s23, 1
      %p60 = por %p58, %p59
      %p62 = scmp.ne.s32.totalorder %s45, %s61
      %p63 = scmp.eq.s32.totalorder %s23, 0
      %p64 = por %p62, %p63
      %s66 = sadd.s32 %s65, 1
      %p69 = scmp.eq.s32.totalorder %s17, 1
      %p70 = scmp.ne.s32.totalorder %s65, %s67
      %p71 = scmp.eq.s32.totalorder %s17, 0
      %p72 = por %p70, %p71
      %p73 = scmp.ne.s32.totalorder %s65, %s67
      %p74 = scmp.eq.s32.totalorder %s22, 1
      %p75 = por %p73, %p74
      %p76 = scmp.ne.s32.totalorder %s67, %s68
      %p77 = scmp.eq.s32.totalorder %s22, 0
      %p78 = por %p76, %p77
      %p79 = scmp.ne.s32.totalorder %s67, %s68
      %p80 = scmp.eq.s32.totalorder %s23, 1
      %p81 = por %p79, %p80
      %p83 = scmp.ne.s32.totalorder %s68, %s82
      %p84 = scmp.eq.s32.totalorder %s23, 0
      %p85 = por %p83, %p84
      %s86 = ssub.s32 %s24, %s36
      %s87 = ssub.s32 %s25, %s32
      %s88 = sor.u32 %s86, %s87
      %p89 = scmp.eq.s32.totalorder %s88, 0
      %s91 = sadd.s32 %s90, 1
      %s92 = scalar_select %p89, %s90, %s91
      %p95 = pneg %p89
      %p96 = scmp.eq.s32.totalorder %s17, 1
      %p97 = por %p95, %p96
      %p98 = scmp.ne.s32.totalorder %s90, %s93
      %p99 = scmp.eq.s32.totalorder %s17, 0
      %p100 = por %p98, %p99
      %p101 = scmp.ne.s32.totalorder %s90, %s93
      %p102 = scmp.eq.s32.totalorder %s22, 1
      %p103 = por %p101, %p102
      %p104 = scmp.ne.s32.totalorder %s93, %s94
      %p105 = scmp.eq.s32.totalorder %s22, 0
      %p106 = por %p104, %p105
      %p107 = scmp.ne.s32.totalorder %s93, %s94
      %p108 = scmp.eq.s32.totalorder %s23, 1
      %p109 = por %p107, %p108
      %p111 = scmp.ne.s32.totalorder %s94, %s110
      %p112 = scmp.eq.s32.totalorder %s23, 0
      %p113 = por %p111, %p112
      %s114 = ssub.s32 %s24, %s36
      %s115 = ssub.s32 %s25, %s32
      %s116 = sor.u32 %s114, %s115
      %p117 = scmp.eq.s32.totalorder %s116, 0
      %s119 = sadd.s32 %s118, 1
      %s120 = scalar_select %p117, %s118, %s119
      %p123 = pneg %p117
      %p124 = scmp.eq.s32.totalorder %s17, 1
      %p125 = por %p123, %p124
      %p126 = scmp.ne.s32.totalorder %s118, %s121
      %p127 = scmp.eq.s32.totalorder %s17, 0
      %p128 = por %p126, %p127
      %p129 = scmp.ne.s32.totalorder %s118, %s121
      %p130 = scmp.eq.s32.totalorder %s22, 1
      %p131 = por %p129, %p130
      %p132 = scmp.ne.s32.totalorder %s121, %s122
      %p133 = scmp.eq.s32.totalorder %s22, 0
      %p134 = por %p132, %p133
      %p135 = scmp.ne.s32.totalorder %s121, %s122
      %p136 = scmp.eq.s32.totalorder %s23, 1
      %p137 = por %p135, %p136
      %p139 = scmp.ne.s32.totalorder %s122, %s138
      %p140 = scmp.eq.s32.totalorder %s23, 0
      %p141 = por %p139, %p140
      %s142 = ssub.s32 %s24, %s36
      %s143 = ssub.s32 %s25, %s32
      %s144 = sor.u32 %s142, %s143
      %p145 = scmp.eq.s32.totalorder %s144, 0
      %s147 = sadd.s32 %s146, 1
      %s148 = scalar_select %p145, %s146, %s147
      %p151 = pneg %p145
      %p152 = scmp.eq.s32.totalorder %s17, 1
      %p153 = por %p151, %p152
      %p154 = scmp.ne.s32.totalorder %s146, %s149
      %p155 = scmp.eq.s32.totalorder %s17, 0
      %p156 = por %p154, %p155
      %p157 = scmp.ne.s32.totalorder %s146, %s149
      %p158 = scmp.eq.s32.totalorder %s22, 1
      %p159 = por %p157, %p158
      %p160 = scmp.ne.s32.totalorder %s149, %s150
      %p161 = scmp.eq.s32.totalorder %s22, 0
      %p162 = por %p160, %p161
      %p163 = scmp.ne.s32.totalorder %s149, %s150
      %p164 = scmp.eq.s32.totalorder %s23, 1
      %p165 = por %p163, %p164
      %p167 = scmp.ne.s32.totalorder %s150, %s166
      %p168 = scmp.eq.s32.totalorder %s23, 0
      %p169 = por %p167, %p168
      %p170 = scmp.le.s32.totalorder 1, %s17
      %p171 = scmp.lt.s32.totalorder %s17, 3
      %p172 = pnand %p170, %p171
      %p173 = pneg %p172
      // Predicated region
      $region9: #{tpu_custom_call.1} parent=5 // pred_check
        _
      $region10: #{tpu_custom_call.1} parent=5 // pred_check_branch
        %175 = sbr.rel (%p172) target = $region12
      $region11: #{tpu_custom_call.1} parent=5 // pred_region
        %s176 = ssub.s32 %s17, 1
        // Predicated region
        $region13: #{tpu_custom_call.1} parent=11 // pred_check
          %p177 = pneg %p78
        $region14: #{tpu_custom_call.1} parent=11 // pred_check_branch
          %179 = sbr.rel (%p177) target = $region16
        $region15: #{tpu_custom_call.1} parent=11 // pred_region
          _
        $region16: #{tpu_custom_call.1} parent=11 // pred_fallthru
          _
      $region12: #{tpu_custom_call.1} parent=5 // pred_fallthru
        _
      %p180 = scmp.lt.s32.totalorder %s17, 2
      // Predicated region
      $region17: #{tpu_custom_call.1} parent=5 // pred_check
        %p181 = pneg %p180
      $region18: #{tpu_custom_call.1} parent=5 // pred_check_branch
        %183 = sbr.rel (%p181) target = $region20
      $region19: #{tpu_custom_call.1} parent=5 // pred_region
        // Predicated region
        $region21: #{tpu_custom_call.1} parent=19 // pred_check
          %p184 = pneg %p51
        $region22: #{tpu_custom_call.1} parent=19 // pred_check_branch
          %186 = sbr.rel (%p184) target = $region24
        $region23: #{tpu_custom_call.1} parent=19 // pred_region
          %s187 = sand.u32 %s41, 1
          %s188 = scalar_lea.sflag [#allocation3], %s187
          %s189 = sand.u32 %s41, 1
          %s190 = smul.addr %s189, 32
          %s191 = scalar_lea.vmem [#allocation2], %s190
          %s193 = ssub.s32 512, 512
          %194 = vsyncadd %s188, %s193
          %s195 = smul.addr %s24, 4
          %s196 = sadd.s32 %s25, %s195
          %s197 = smul.addr %s196, 128
          %s198 = scalar_lea.hbm %s0, %s197
          %s199 = sshll.u32 %s191, 4
          %s200 = int_to_ptr.vmem [resolvable:$true] %s199
          %205 = dma.hbm_to_vmem [thread:$0]  %s198, 512, %s200, %s188, 128, 128, 8
        $region24: #{tpu_custom_call.1} parent=19 // pred_fallthru
          _
      $region20: #{tpu_custom_call.1} parent=5 // pred_fallthru
        _
      %p206 = scmp.le.s32.totalorder 1, %s17
      %p207 = scmp.lt.s32.totalorder %s17, 3
      %p208 = pnand %p206, %p207
      %p209 = pneg %p208
      // Predicated region
      $region25: #{tpu_custom_call.1} parent=5 // pred_check
        _
      $region26: #{tpu_custom_call.1} parent=5 // pred_check_branch
        %211 = sbr.rel (%p208) target = $region28
      $region27: #{tpu_custom_call.1} parent=5 // pred_region
        %s212 = ssub.s32 %s17, 1
        %s213 = sand.u32 %s44, 1
        %s214 = scalar_lea.sflag [#allocation3], %s213
        %s215 = sand.u32 %s44, 1
        %s216 = smul.addr %s215, 32
        %s217 = scalar_lea.vmem [#allocation2], %s216
        // Predicated region
        $region29: #{tpu_custom_call.1} parent=27 // pred_check
          %p218 = pneg %p57
        $region30: #{tpu_custom_call.1} parent=27 // pred_check_branch
          %220 = sbr.rel (%p218) target = $region32
        $region31: #{tpu_custom_call.1} parent=27 // pred_region
          %221 = dma.done %s214, 512
        $region32: #{tpu_custom_call.1} parent=27 // pred_fallthru
          _
        %s222 = sand.u32 %s44, 1
        %s223 = scalar_lea.sflag [#allocation3], %s222
        %s224 = sand.u32 %s44, 1
        %s225 = smul.addr %s224, 32
        %s226 = scalar_lea.vmem [#allocation2], %s225
        %p227 = pneg %p57
        %p228 = pneg %p54
        %p229 = pneg %p78
        %p230 = pneg %p75
        %p231 = pneg %p106
        %p232 = pneg %p103
        %p233 = scmp.lt.s32.totalorder %s26, 1
        %s234 = scalar_select %p233, %s26, 1
        %p235 = scmp.lt.s32.totalorder %s27, 0
        %s236 = scalar_select %p235, %s27, 0
        %s237 = sadd.s32 %s236, %s234
        %s238 = smul.addr %s237, 4
        %s239 = scalar_lea.vmem %s2, %s238
        %p240 = pneg %p134
        %p241 = pneg %p131
        %p242 = scmp.lt.s32.totalorder %s26, 1
        %s243 = scalar_select %p242, %s26, 1
        %p244 = scmp.lt.s32.totalorder %s27, 0
        %s245 = scalar_select %p244, %s27, 0
        %s246 = sadd.s32 %s245, %s243
        %s247 = smul.addr %s246, 4
        %s248 = scalar_lea.vmem %s3, %s247
        %p249 = pneg %p162
        %p250 = pneg %p159
        %s251 = sand.u32 %s149, 1
        %s252 = scalar_lea.sflag [#allocation4], %s251
        %s253 = sand.u32 %s149, 1
        %s254 = smul.addr %s253, 32
        %s255 = scalar_lea.vmem [#allocation5], %s254
        %p256 = scmp.lt.s32.totalorder %s26, 1
        %s257 = scalar_select %p256, %s26, 1
        %p258 = scmp.lt.s32.totalorder %s27, 0
        %s259 = scalar_select %p258, %s27, 0
        %s260 = sadd.s32 %s259, %s257
        %s261 = smul.addr %s260, 4
        %s262 = scalar_lea.vmem %s2, %s261
        %p263 = scmp.lt.s32.totalorder %s26, 1
        %s264 = scalar_select %p263, %s26, 1
        %p265 = scmp.lt.s32.totalorder %s27, 0
        %s266 = scalar_select %p265, %s27, 0
        %s267 = sadd.s32 %s266, %s264
        %s268 = smul.addr %s267, 4
        %s269 = scalar_lea.vmem %s3, %s268
        %v270 = vld [vmem:[%s217] sm:$0xff]
        %v271 = vld [vmem:[%s217 + $0x8] sm:$0xff]
        %v272 = vld [vmem:[%s217 + $0x10] sm:$0xff]
        %v273 = vld [vmem:[%s217 + $0x18] sm:$0xff]
        %vm274 = vcmask 261120
        %v275 = vsel %vm274, %v270, 0.0
        %276 = vadd.xlane.f32.xlu0 %v275
        %v277 = vpop.xlane.xlu0 %276
        %v278 = vsel %vm274, %v271, 0.0
        %279 = vadd.xlane.f32.xlu0 %v278
        %v280 = vpop.xlane.xlu0 %279
        %v281 = vsel %vm274, %v272, 0.0
        %282 = vadd.xlane.f32.xlu0 %v281
        %v283 = vpop.xlane.xlu0 %282
        %v284 = vsel %vm274, %v273, 0.0
        %285 = vadd.xlane.f32.xlu0 %v284
        %v286 = vpop.xlane.xlu0 %285
        %v287 = vmul.f32 %v270, %v270
        %v288 = vmul.f32 %v271, %v271
        %v289 = vmul.f32 %v272, %v272
        %v290 = vmul.f32 %v273, %v273
        %v291 = vsel %vm274, %v287, 0.0
        %292 = vadd.xlane.f32.xlu0 %v291
        %v293 = vpop.xlane.xlu0 %292
        %v294 = vsel %vm274, %v288, 0.0
        %295 = vadd.xlane.f32.xlu0 %v294
        %v296 = vpop.xlane.xlu0 %295
        %v297 = vsel %vm274, %v289, 0.0
        %298 = vadd.xlane.f32.xlu0 %v297
        %v299 = vpop.xlane.xlu0 %298
        %v300 = vsel %vm274, %v290, 0.0
        %301 = vadd.xlane.f32.xlu0 %v300
        %v302 = vpop.xlane.xlu0 %301
        %v307 = vlaneseq
        %v308 = vand.u32 %v307, 127
        %v309 = vlaneseq
        %v310 = vshrl.u32 %v309, 7
        %v311 = vsub.s32 %v308, %v310
        %v312 = vrot.slane %v277, %v311
        %v313 = vlaneseq
        %v314 = vshrl.u32 %v313, 7
        %v315 = vsub.s32 %v308, %v314
        %v316 = vrot.slane %v280, %v315
        %v317 = vlaneseq
        %v318 = vshrl.u32 %v317, 7
        %v319 = vsub.s32 %v308, %v318
        %v320 = vrot.slane %v283, %v319
        %v321 = vlaneseq
        %v322 = vshrl.u32 %v321, 7
        %v323 = vsub.s32 %v308, %v322
        %v324 = vrot.slane %v286, %v323
        %vm325 = vcmask 1041409
        %v326 = vsel %vm325, %v316, %v312
        %vm327 = vcmask 1042434
        %v328 = vsel %vm327, %v320, %v326
        %vm329 = vcmask 1043459
        %v330 = vsel %vm329, %v324, %v328
        %vm332 = vcmask 60416
        %v333 = vsel %vm332, %v330, 0.0
        %334 = vadd.xlane.f32.xlu0 %v333
        %v335 = vpop.xlane.xlu0 %334
        %vm336 = vcmask 3072
        %337 = vst.msk [vmem:[%s262] sm:$0xf] %vm336, %v335
        %v342 = vlaneseq
        %v343 = vshrl.u32 %v342, 7
        %v344 = vsub.s32 %v308, %v343
        %v345 = vrot.slane %v293, %v344
        %v346 = vlaneseq
        %v347 = vshrl.u32 %v346, 7
        %v348 = vsub.s32 %v308, %v347
        %v349 = vrot.slane %v296, %v348
        %v350 = vlaneseq
        %v351 = vshrl.u32 %v350, 7
        %v352 = vsub.s32 %v308, %v351
        %v353 = vrot.slane %v299, %v352
        %v354 = vlaneseq
        %v355 = vshrl.u32 %v354, 7
        %v356 = vsub.s32 %v308, %v355
        %v357 = vrot.slane %v302, %v356
        %v358 = vsel %vm325, %v349, %v345
        %v359 = vsel %vm327, %v353, %v358
        %v360 = vsel %vm329, %v357, %v359
        %v362 = vsel %vm332, %v360, 0.0
        %363 = vadd.xlane.f32.xlu0 %v362
        %v364 = vpop.xlane.xlu0 %363
        %365 = vst.msk [vmem:[%s269] sm:$0xf] %vm336, %v364
        %v366 = vld [vmem:[%s1] sm:$0xff]
        %v367 = vld [vmem:[%s1 + $0x8] sm:$0xff]
        %vm368 = vcmask 130048
        %v370 = vsel %vm368, %v270, 0
        %v373 = vsel %vm368, %v271, 0
        %v376 = vsel %vm368, %v272, 0
        %v379 = vsel %vm368, %v273, 0
        %381 = vmatprep.subr.mxu0 0.0
        %382 = vmatpush1.msra.mxu0 %v366
        %383 = vmatprep.subr.mxu0 0.0
        %384 = vmatpush1.msra.mxu0 %v367
        %385 = vmatprep.subr.mxu0 0.0
        %386 = vmatpush1.msra.mxu0 0.0
        %387 = vmatprep.subr.mxu0 0.0
        %388 = vmatpush1.msra.mxu0 0.0
        %389 = vmatprep.subr.mxu0 0.0
        %390 = vmatpush1.msra.mxu0 0.0
        %391 = vmatprep.subr.mxu0 0.0
        %392 = vmatpush1.msra.mxu0 0.0
        %393 = vmatprep.subr.mxu0 0.0
        %394 = vmatpush1.msra.mxu0 0.0
        %395 = vmatprep.subr.mxu0 0.0
        %396 = vmatpush1.msra.mxu0 0.0
        %397 = vmatprep.subr.mxu0 0.0
        %398 = vmatpush1.msra.mxu0 0.0
        %399 = vmatprep.subr.mxu0 0.0
        %400 = vmatpush1.msra.mxu0 0.0
        %401 = vmatprep.subr.mxu0 0.0
        %402 = vmatpush1.msra.mxu0 0.0
        %403 = vmatprep.subr.mxu0 0.0
        %404 = vmatpush1.msra.mxu0 0.0
        %405 = vmatprep.subr.mxu0 0.0
        %406 = vmatpush1.msra.mxu0 0.0
        %407 = vmatprep.subr.mxu0 0.0
        %408 = vmatpush1.msra.mxu0 0.0
        %409 = vmatprep.subr.mxu0 0.0
        %410 = vmatpush1.msra.mxu0 0.0
        %411 = vmatprep.subr.mxu0 0.0
        %412 = vmatpush1.msra.mxu0 0.0
        %413 = vmatprep.subr.mxu0 0.0
        %414 = vmatpush1.msra.mxu0 0.0
        %415 = vmatprep.subr.mxu0 0.0
        %416 = vmatpush1.msra.mxu0 0.0
        %417 = vmatprep.subr.mxu0 0.0
        %418 = vmatpush1.msra.mxu0 0.0
        %419 = vmatprep.subr.mxu0 0.0
        %420 = vmatpush1.msra.mxu0 0.0
        %421 = vmatprep.subr.mxu0 0.0
        %422 = vmatpush1.msra.mxu0 0.0
        %423 = vmatprep.subr.mxu0 0.0
        %424 = vmatpush1.msra.mxu0 0.0
        %425 = vmatprep.subr.mxu0 0.0
        %426 = vmatpush1.msra.mxu0 0.0
        %427 = vmatprep.subr.mxu0 0.0
        %428 = vmatpush1.msra.mxu0 0.0
        %429 = vmatprep.subr.mxu0 0.0
        %430 = vmatpush1.msra.mxu0 0.0
        %431 = vmatprep.subr.mxu0 0.0
        %432 = vmatpush1.msra.mxu0 0.0
        %433 = vmatprep.subr.mxu0 0.0
        %434 = vmatpush1.msra.mxu0 0.0
        %435 = vmatprep.subr.mxu0 0.0
        %436 = vmatpush1.msra.mxu0 0.0
        %437 = vmatprep.subr.mxu0 0.0
        %438 = vmatpush1.msra.mxu0 0.0
        %439 = vmatprep.subr.mxu0 0.0
        %440 = vmatpush1.msra.mxu0 0.0
        %441 = vmatprep.subr.mxu0 0.0
        %442 = vmatpush1.msra.mxu0 0.0
        %443 = vmatprep.subr.mxu0 0.0
        %444 = vmatpush1.msra.mxu0 0.0
        %445 = vmatprep.mubr.f32.mxu0 0.0
        %446 = vmatmul.mubr.f32.gmra.mrb[0].mxu0 %v370
        %v447 = vpop.f32.mrb[0].mxu0
        %v448 = vadd.f32 0.0, %v447
        %v449 = vpop.f32.mrb[0].mxu0
        %450 = vmatprep.mubr.f32.mxu0 0.0
        %451 = vmatmul.mubr.f32.gmra.mrb[0].mxu0 %v373
        %v452 = vpop.f32.mrb[0].mxu0
        %v453 = vadd.f32 0.0, %v452
        %v454 = vpop.f32.mrb[0].mxu0
        %455 = vmatprep.mubr.f32.mxu0 0.0
        %456 = vmatmul.mubr.f32.gmra.mrb[0].mxu0 %v376
        %v457 = vpop.f32.mrb[0].mxu0
        %v458 = vadd.f32 0.0, %v457
        %v459 = vpop.f32.mrb[0].mxu0
        %460 = vmatprep.mubr.f32.mxu0 0.0
        %461 = vmatmul.mubr.f32.gmra.mrb[0].mxu0 %v379
        %v462 = vpop.f32.mrb[0].mxu0
        %v463 = vadd.f32 0.0, %v462
        %v464 = vpop.f32.mrb[0].mxu0
        %465 = vdwg.mxu0
        %vm466 = vcmask 64512
        %467 = vst.msk [vmem:[%s255] sm:$0xff] %vm466, %v448
        %468 = vst.msk [vmem:[%s255 + $0x8] sm:$0xff] %vm466, %v453
        %469 = vst.msk [vmem:[%s255 + $0x10] sm:$0xff] %vm466, %v458
        %470 = vst.msk [vmem:[%s255 + $0x18] sm:$0xff] %vm466, %v463
        %p471 = scmp.lt.s32.totalorder %s26, 1
        %s472 = scalar_select %p471, %s26, 1
        %p473 = scmp.lt.s32.totalorder %s27, 0
        %s474 = scalar_select %p473, %s27, 0
        %s475 = sadd.s32 %s474, %s472
        %s476 = smul.addr %s475, 4
        %s477 = scalar_lea.vmem %s2, %s476
        %p478 = scmp.lt.s32.totalorder %s26, 1
        %s479 = scalar_select %p478, %s26, 1
        %p480 = scmp.lt.s32.totalorder %s27, 0
        %s481 = scalar_select %p480, %s27, 0
        %s482 = sadd.s32 %s481, %s479
        %s483 = smul.addr %s482, 4
        %s484 = scalar_lea.vmem %s3, %s483
        %s485 = sand.u32 %s149, 1
        %s486 = scalar_lea.sflag [#allocation4], %s485
        %s487 = sand.u32 %s149, 1
        %s488 = smul.addr %s487, 32
        %s489 = scalar_lea.vmem [#allocation5], %s488
        // Predicated region
        $region33: #{tpu_custom_call.1} parent=27 // pred_check
          %p490 = pneg %p103
        $region34: #{tpu_custom_call.1} parent=27 // pred_check_branch
          %492 = sbr.rel (%p490) target = $region36
        $region35: #{tpu_custom_call.1} parent=27 // pred_region
          _
        $region36: #{tpu_custom_call.1} parent=27 // pred_fallthru
          _
        // Predicated region
        $region37: #{tpu_custom_call.1} parent=27 // pred_check
          %p493 = pneg %p131
        $region38: #{tpu_custom_call.1} parent=27 // pred_check_branch
          %495 = sbr.rel (%p493) target = $region40
        $region39: #{tpu_custom_call.1} parent=27 // pred_region
          _
        $region40: #{tpu_custom_call.1} parent=27 // pred_fallthru
          _
        // Predicated region
        $region41: #{tpu_custom_call.1} parent=27 // pred_check
          %p496 = pneg %p159
        $region42: #{tpu_custom_call.1} parent=27 // pred_check_branch
          %498 = sbr.rel (%p496) target = $region44
        $region43: #{tpu_custom_call.1} parent=27 // pred_region
          %s500 = ssub.s32 512, 512
          %501 = vsyncadd %s486, %s500
          %s502 = smul.addr %s26, 4
          %s503 = sadd.s32 %s27, %s502
          %s504 = smul.addr %s503, 128
          %s505 = scalar_lea.hbm %s4, %s504
          %s506 = sshll.u32 %s489, 4
          %s507 = int_to_ptr.vmem [resolvable:$true] %s506
          %512 = dma.vmem_to_hbm [thread:$0]  %s507, 512, %s505, %s486, 128, 128, 8
        $region44: #{tpu_custom_call.1} parent=27 // pred_fallthru
          _
      $region28: #{tpu_custom_call.1} parent=5 // pred_fallthru
        _
      %p513 = scmp.le.s32.totalorder 2, %s17
      // Predicated region
      $region45: #{tpu_custom_call.1} parent=5 // pred_check
        %p514 = pneg %p513
      $region46: #{tpu_custom_call.1} parent=5 // pred_check_branch
        %516 = sbr.rel (%p514) target = $region48
      $region47: #{tpu_custom_call.1} parent=5 // pred_region
        %s517 = ssub.s32 %s17, 2
        // Predicated region
        $region49: #{tpu_custom_call.1} parent=47 // pred_check
          %p518 = pneg %p109
        $region50: #{tpu_custom_call.1} parent=47 // pred_check_branch
          %520 = sbr.rel (%p518) target = $region52
        $region51: #{tpu_custom_call.1} parent=47 // pred_region
          %p521 = scmp.lt.s32.totalorder %s28, 1
          %s522 = scalar_select %p521, %s28, 1
          %p523 = scmp.lt.s32.totalorder %s29, 0
          %s524 = scalar_select %p523, %s29, 0
          %s525 = sadd.s32 %s524, %s522
          %s526 = smul.addr %s525, 4
          %s527 = scalar_lea.vmem %s2, %s526
        $region52: #{tpu_custom_call.1} parent=47 // pred_fallthru
          _
        // Predicated region
        $region53: #{tpu_custom_call.1} parent=47 // pred_check
          %p528 = pneg %p137
        $region54: #{tpu_custom_call.1} parent=47 // pred_check_branch
          %530 = sbr.rel (%p528) target = $region56
        $region55: #{tpu_custom_call.1} parent=47 // pred_region
          %p531 = scmp.lt.s32.totalorder %s28, 1
          %s532 = scalar_select %p531, %s28, 1
          %p533 = scmp.lt.s32.totalorder %s29, 0
          %s534 = scalar_select %p533, %s29, 0
          %s535 = sadd.s32 %s534, %s532
          %s536 = smul.addr %s535, 4
          %s537 = scalar_lea.vmem %s3, %s536
        $region56: #{tpu_custom_call.1} parent=47 // pred_fallthru
          _
        // Predicated region
        $region57: #{tpu_custom_call.1} parent=47 // pred_check
          %p538 = pneg %p165
        $region58: #{tpu_custom_call.1} parent=47 // pred_check_branch
          %540 = sbr.rel (%p538) target = $region60
        $region59: #{tpu_custom_call.1} parent=47 // pred_region
          %s541 = sand.u32 %s150, 1
          %s542 = scalar_lea.sflag [#allocation4], %s541
          %s543 = sand.u32 %s150, 1
          %s544 = smul.addr %s543, 32
          %s545 = scalar_lea.vmem [#allocation5], %s544
          %546 = dma.done %s542, 512
        $region60: #{tpu_custom_call.1} parent=47 // pred_fallthru
          _
      $region48: #{tpu_custom_call.1} parent=5 // pred_fallthru
        _
    $region6: #{tpu_custom_call.1} parent=1 // loop_footer
      %s21 = sadd.s32 1, %s17
    $region7: #{tpu_custom_call.1} parent=1 // loop_footer_branch
      %16 = sbr.rel target = $region3
    $region8: #{tpu_custom_call.1} parent=1 // loop_exit
      _
    %547 = vsyncpa [#allocation3], 1
    %s548 = scalar_lea.sflag [#allocation3], 1
    %549 = vsyncpa %s548, 1
    %550 = vsyncpa [#allocation4], 1
    %s551 = scalar_lea.sflag [#allocation4], 1
    %552 = vsyncpa %s551, 1

</llo_original>
